<compile_context>
chip_gen: v6e
topology: v6e:2x2x1
jax: 0.10.0
libtpu: 0.0.40
codegen_flags: <defaults>
</compile_context>

<pallas_src>
import jax
import jax.numpy as jnp
from jax import lax
from jax.experimental import pallas as pl
from jax.experimental.pallas import tpu as pltpu

LANE = 128


def _make_kernel(bn, tm, R, acc_rows, need_row_mask):
    """Builds the per-block reduction kernel (bn, tm, R, acc_rows are static)."""

    def fold(x):
        # (bn, tm, 128) f32 -> (acc_rows, 128) partial sums.  Pure VPU adds:
        # the axis-0 reduce adds whole slabs, and the reshape only splits the
        # sublane dim (tm % 8 == 0 whenever it fires) so it is layout-free.
        y = x[0] if bn == 1 else jnp.sum(x, axis=0)
        if acc_rows != tm:
            y = y.reshape(tm // acc_rows, acc_rows, LANE).sum(axis=0)
        return y

    def kernel(gt_s_ref, pred_s_ref, ign_ref, gt_geo_ref, pred_geo_ref, acc_ref):
        j = pl.program_id(1)

        @pl.when(j == 0)
        def _():
            acc_ref[...] = jnp.zeros_like(acc_ref)

        f32 = jnp.float32
        gt_s = gt_s_ref[...].astype(f32)                                # (bn, tm, 128)
        pred_s = pred_s_ref[...].astype(f32) * (1.0 - ign_ref[...].astype(f32))

        gg = gt_geo_ref[...].astype(f32)                                # (bn, 5, tm, 128)
        pg = pred_geo_ref[...].astype(f32)
        d1_gt, d2_gt, d3_gt, d4_gt, th_gt = (gg[:, c] for c in range(5))
        d1_p, d2_p, d3_p, d4_p, th_p = (pg[:, c] for c in range(5))

        area_gt = (d1_gt + d3_gt) * (d2_gt + d4_gt)
        area_p = (d1_p + d3_p) * (d2_p + d4_p)
        w_u = jnp.minimum(d2_gt, d2_p) + jnp.minimum(d4_gt, d4_p)
        h_u = jnp.minimum(d1_gt, d1_p) + jnp.minimum(d3_gt, d3_p)
        a_i = w_u * h_u
        a_u = area_gt + area_p - a_i
        # -log((a_i + 1) / (a_u + 1)) == log(a_u + 1) - log(a_i + 1)
        iou = jnp.log(a_u + 1.0) - jnp.log(a_i + 1.0)
        ang = 1.0 - jnp.cos(th_p - th_gt)

        inter = gt_s * pred_s
        iou_w = iou * gt_s
        ang_w = ang * gt_s

        if need_row_mask:
            # Last block along the row axis is ragged; OOB tile contents are
            # undefined, so mask every contribution (including the weighted
            # geo terms, to keep log()/cos() garbage from leaking via 0*NaN).
            row_ids = j * tm + lax.broadcasted_iota(jnp.int32, (bn, tm, LANE), 1)
            valid = row_ids < R
            zero = jnp.zeros_like(gt_s)
            gt_s = jnp.where(valid, gt_s, zero)
            pred_s = jnp.where(valid, pred_s, zero)
            inter = jnp.where(valid, inter, zero)
            iou_w = jnp.where(valid, iou_w, zero)
            ang_w = jnp.where(valid, ang_w, zero)

        acc_ref[0, 0] = acc_ref[0, 0] + fold(gt_s)     # sum(gt_score)
        acc_ref[0, 1] = acc_ref[0, 1] + fold(pred_s)   # sum(pred_score*(1-ignored))
        acc_ref[0, 2] = acc_ref[0, 2] + fold(inter)    # dice intersection
        acc_ref[0, 3] = acc_ref[0, 3] + fold(iou_w)    # sum(iou_loss * gt_score)
        acc_ref[0, 4] = acc_ref[0, 4] + fold(ang_w)    # sum(angle_loss * gt_score)

    return kernel


def east_loss(gt_score, pred_score, gt_geo, pred_geo, ignored_map,
              weight_angle=10.0):
    N, _, H, W = gt_score.shape
    HW = H * W
    HW_pad = ((HW + LANE - 1) // LANE) * LANE
    R = HW_pad // LANE                       # 128-wide rows per sample

    # --- Tile selection: ~1024 rows (13 channels * 1024 * 128 * 4B ~= 6.8 MiB)
    #     per grid step, double-buffered ~13.6 MiB (fits v7x's 64 MiB VMEM with
    #     headroom).  Cap bn at N//2 so the "parallel" batch axis has at least
    #     two blocks for the two v7x TensorCores.  bn is a divisor of N so no
    #     batch-ragged block ever exists.
    TARGET_ROWS = 1024
    tm = R if R <= TARGET_ROWS else TARGET_ROWS      # 1024 is a multiple of 8/16/32
    bn_cap = max(1, min(TARGET_ROWS // tm, max(1, N // 2)))
    bn = 1
    for d in range(bn_cap, 0, -1):
        if N % d == 0:
            bn = d
            break
    NB = N // bn
    J = (R + tm - 1) // tm
    need_row_mask = (R % tm) != 0
    acc_rows = 8 if (tm % 8 == 0) else tm

    def prep_score(x):
        v = x.reshape(N, HW)                           # free reshape, native dtype
        if HW_pad != HW:
            # TODO(synk): rare case (H*W not 128-aligned); could be folded into
            # the in-kernel mask to avoid this extra HBM pass.
            v = jnp.pad(v, ((0, 0), (0, HW_pad - HW)))
        return v.reshape(N, R, LANE)

    def prep_geo(x):
        v = x.reshape(N, 5, HW)                        # free reshape (no transpose)
        if HW_pad != HW:
            v = jnp.pad(v, ((0, 0), (0, 0), (0, HW_pad - HW)))
        return v.reshape(N, 5, R, LANE)

    gt_s = prep_score(gt_score)
    pred_s = prep_score(pred_score)
    ign = prep_score(ignored_map)
    gt_g = prep_geo(gt_geo)
    pred_g = prep_geo(pred_geo)

    kernel = _make_kernel(bn, tm, R, acc_rows, need_row_mask)

    score_bytes = gt_s.dtype.itemsize + pred_s.dtype.itemsize + ign.dtype.itemsize
    geo_bytes = 5 * (gt_g.dtype.itemsize + pred_g.dtype.itemsize)
    cost = pl.CostEstimate(
        flops=30 * N * HW,
        transcendentals=3 * N * HW,
        bytes_accessed=(score_bytes + geo_bytes) * N * HW
        + 5 * NB * acc_rows * LANE * 4,
    )

    partials = pl.pallas_call(
        kernel,
        out_shape=jax.ShapeDtypeStruct((NB, 5, acc_rows, LANE), jnp.float32),
        grid_spec=pltpu.PrefetchScalarGridSpec(
            num_scalar_prefetch=0,
            grid=(NB, J),
            in_specs=[
                pl.BlockSpec((bn, tm, LANE), lambda n, j: (n, j, 0)),
                pl.BlockSpec((bn, tm, LANE), lambda n, j: (n, j, 0)),
                pl.BlockSpec((bn, tm, LANE), lambda n, j: (n, j, 0)),
                pl.BlockSpec((bn, 5, tm, LANE), lambda n, j: (n, 0, j, 0)),
                pl.BlockSpec((bn, 5, tm, LANE), lambda n, j: (n, 0, j, 0)),
            ],
            out_specs=pl.BlockSpec((1, 5, acc_rows, LANE), lambda n, j: (n, 0, 0, 0)),
        ),
        compiler_params=pltpu.CompilerParams(
            dimension_semantics=("parallel", "arbitrary"),
            vmem_limit_bytes=32 * 1024 * 1024,
        ),
        cost_estimate=cost,
    )(gt_s, pred_s, ign, gt_g, pred_g)

    sums = jnp.sum(partials, axis=(0, 2, 3))    # (5,) tiny final reduce
    sum_gt = sums[0]
    sum_pred = sums[1]
    intersection = sums[2]
    iou_weighted = sums[3]
    angle_weighted = sums[4]

    smooth = jnp.float32(1e-5)
    classify_loss = 1.0 - 2.0 * (intersection + smooth) / (sum_gt + sum_pred + smooth)
    # Guard the denominator so the masked (sum_gt < 1) branch never sees 0/0.
    denom = jnp.where(sum_gt < 1.0, jnp.float32(1.0), sum_gt)
    iou_loss = iou_weighted / denom
    angle_loss = angle_weighted / denom
    geo_loss = weight_angle * angle_loss + iou_loss
    total = geo_loss + classify_loss

    # torch early-return `if torch.sum(gt_score) < 1: return ... * 0`
    return jnp.where(sum_gt < 1.0, jnp.float32(0.0), total)


def east_loss_ref(gt_score, pred_score, gt_geo, pred_geo, ignored_map,
                  weight_angle=10.0):
    """Pure-JAX reference mirroring the PyTorch module."""
    smooth = 1e-5
    pred_s = pred_score * (1.0 - ignored_map)
    intersection = jnp.sum(gt_score * pred_s)
    union = jnp.sum(gt_score) + jnp.sum(pred_s)
    classify_loss = 1.0 - 2.0 * (intersection + smooth) / (union + smooth)

    d1_gt, d2_gt, d3_gt, d4_gt, th_gt = jnp.split(gt_geo, 5, axis=1)
    d1_p, d2_p, d3_p, d4_p, th_p = jnp.split(pred_geo, 5, axis=1)
    area_gt = (d1_gt + d3_gt) * (d2_gt + d4_gt)
    area_pred = (d1_p + d3_p) * (d2_p + d4_p)
    w_union = jnp.minimum(d2_gt, d2_p) + jnp.minimum(d4_gt, d4_p)
    h_union = jnp.minimum(d1_gt, d1_p) + jnp.minimum(d3_gt, d3_p)
    area_intersect = w_union * h_union
    area_union = area_gt + area_pred - area_intersect
    iou = -jnp.log((area_intersect + 1.0) / (area_union + 1.0))
    ang = 1.0 - jnp.cos(th_p - th_gt)
    sg = jnp.sum(gt_score)
    iou_loss = jnp.sum(iou * gt_score) / sg
    angle_loss = jnp.sum(ang * gt_score) / sg
    total = weight_angle * angle_loss + iou_loss + classify_loss
    return jnp.where(sg < 1.0, jnp.float32(0.0), total)


if __name__ == "__main__":
    key = jax.random.PRNGKey(0)
    k1, k2, k3, k4, k5 = jax.random.split(key, 5)

    N, H, W = 2, 16, 16
    gt_score = (jax.random.uniform(k1, (N, 1, H, W)) > 0.5).astype(jnp.float32)
    pred_score = jax.random.uniform(k2, (N, 1, H, W), dtype=jnp.float32)
    ignored_map = (jax.random.uniform(k3, (N, 1, H, W)) > 0.9).astype(jnp.float32)

    # geo: channels 0..3 are positive distances, channel 4 is an angle
    gt_geo_d = jax.random.uniform(k4, (N, 4, H, W), dtype=jnp.float32) * 10.0
    gt_geo_th = (jax.random.uniform(k4, (N, 1, H, W), dtype=jnp.float32) - 0.5) * jnp.pi
    gt_geo = jnp.concatenate([gt_geo_d, gt_geo_th], axis=1)

    pred_geo_d = jax.random.uniform(k5, (N, 4, H, W), dtype=jnp.float32) * 10.0
    pred_geo_th = (jax.random.uniform(k5, (N, 1, H, W), dtype=jnp.float32) - 0.5) * jnp.pi
    pred_geo = jnp.concatenate([pred_geo_d, pred_geo_th], axis=1)

    out = east_loss(gt_score, pred_score, gt_geo, pred_geo, ignored_map)
    out = jax.block_until_ready(out)

    ref = east_loss_ref(gt_score, pred_score, gt_geo, pred_geo, ignored_map)
    assert jnp.allclose(out, ref, rtol=2e-4, atol=1e-5), (out, ref)

    print("KERNEL_OK")
</pallas_src>

<mosaic_0001>
module attributes {stable_mosaic.version = 11 : i64} {
  func.func @kernel(%arg0: i32, %arg1: i32, %arg2: memref<1x2x128xf32, #tpu.memory_space<vmem>>, %arg3: memref<1x2x128xf32, #tpu.memory_space<vmem>>, %arg4: memref<1x2x128xf32, #tpu.memory_space<vmem>>, %arg5: memref<1x5x2x128xf32, #tpu.memory_space<vmem>>, %arg6: memref<1x5x2x128xf32, #tpu.memory_space<vmem>>, %arg7: memref<1x5x2x128xf32, #tpu.memory_space<vmem>>) attributes {dimension_semantics = [#tpu.dimension_semantics<parallel>, #tpu.dimension_semantics<arbitrary>], iteration_bounds = array<i64: 2, 1>, scalar_prefetch = 0 : i64, scratch_operands = 0 : i64, tpu.core_type = #tpu.core_type<tc>, window_params = [{transform_indices = @transform_0, window_bounds = array<i64: 1, 2, 128>}, {transform_indices = @transform_1, window_bounds = array<i64: 1, 2, 128>}, {transform_indices = @transform_2, window_bounds = array<i64: 1, 2, 128>}, {transform_indices = @transform_3, window_bounds = array<i64: 1, 5, 2, 128>}, {transform_indices = @transform_4, window_bounds = array<i64: 1, 5, 2, 128>}, {transform_indices = @transform_5, window_bounds = array<i64: 1, 5, 2, 128>}]} {
    %c0_i32 = arith.constant 0 : i32
    %0 = arith.cmpi eq, %arg1, %c0_i32 : i32
    %1 = arith.extui %0 : i1 to i32
    %c0_i32_0 = arith.constant 0 : i32
    %2 = arith.cmpi ne, %1, %c0_i32_0 : i32
    scf.if %2 {
      %cst_56 = arith.constant 0.000000e+00 : f32
      %95 = vector.broadcast %cst_56 : f32 to vector<1x5x2x128xf32>
      %c0_57 = arith.constant 0 : index
      %c0_58 = arith.constant 0 : index
      %c0_59 = arith.constant 0 : index
      %c0_60 = arith.constant 0 : index
      %96 = vector.load %arg7[%c0_57, %c0_58, %c0_59, %c0_60] : memref<1x5x2x128xf32, #tpu.memory_space<vmem>>, vector<1x5x2x128xf32>
      tpu.vector_store %arg7[%c0_57, %c0_58, %c0_59, %c0_60], %95 {strides = array<i32>} : memref<1x5x2x128xf32, #tpu.memory_space<vmem>>, vector<1x5x2x128xf32>,
    } else {
    }
    %c0 = arith.constant 0 : index
    %c0_1 = arith.constant 0 : index
    %c0_2 = arith.constant 0 : index
    %3 = vector.load %arg2[%c0, %c0_1, %c0_2] : memref<1x2x128xf32, #tpu.memory_space<vmem>>, vector<1x2x128xf32>
    %c0_3 = arith.constant 0 : index
    %c0_4 = arith.constant 0 : index
    %c0_5 = arith.constant 0 : index
    %4 = vector.load %arg3[%c0_3, %c0_4, %c0_5] : memref<1x2x128xf32, #tpu.memory_space<vmem>>, vector<1x2x128xf32>
    %c0_6 = arith.constant 0 : index
    %c0_7 = arith.constant 0 : index
    %c0_8 = arith.constant 0 : index
    %5 = vector.load %arg4[%c0_6, %c0_7, %c0_8] : memref<1x2x128xf32, #tpu.memory_space<vmem>>, vector<1x2x128xf32>
    %cst = arith.constant 1.000000e+00 : f32
    %6 = vector.broadcast %cst : f32 to vector<1x2x128xf32>
    %7 = arith.subf %6, %5 : vector<1x2x128xf32>
    %8 = arith.mulf %4, %7 : vector<1x2x128xf32>
    %c0_9 = arith.constant 0 : index
    %c0_10 = arith.constant 0 : index
    %c0_11 = arith.constant 0 : index
    %c0_12 = arith.constant 0 : index
    %9 = vector.load %arg5[%c0_9, %c0_10, %c0_11, %c0_12] : memref<1x5x2x128xf32, #tpu.memory_space<vmem>>, vector<1x5x2x128xf32>
    %c0_13 = arith.constant 0 : index
    %c0_14 = arith.constant 0 : index
    %c0_15 = arith.constant 0 : index
    %c0_16 = arith.constant 0 : index
    %10 = vector.load %arg6[%c0_13, %c0_14, %c0_15, %c0_16] : memref<1x5x2x128xf32, #tpu.memory_space<vmem>>, vector<1x5x2x128xf32>
    %11 = vector.extract_strided_slice %9 {offsets = [0, 0, 0, 0], sizes = [1, 1, 2, 128], strides = [1, 1, 1, 1]} : vector<1x5x2x128xf32> to vector<1x1x2x128xf32>
    %12 = vector.shape_cast %11 : vector<1x1x2x128xf32> to vector<1x2x128xf32>
    %13 = vector.extract_strided_slice %9 {offsets = [0, 1, 0, 0], sizes = [1, 1, 2, 128], strides = [1, 1, 1, 1]} : vector<1x5x2x128xf32> to vector<1x1x2x128xf32>
    %14 = vector.shape_cast %13 : vector<1x1x2x128xf32> to vector<1x2x128xf32>
    %15 = vector.extract_strided_slice %9 {offsets = [0, 2, 0, 0], sizes = [1, 1, 2, 128], strides = [1, 1, 1, 1]} : vector<1x5x2x128xf32> to vector<1x1x2x128xf32>
    %16 = vector.shape_cast %15 : vector<1x1x2x128xf32> to vector<1x2x128xf32>
    %17 = vector.extract_strided_slice %9 {offsets = [0, 3, 0, 0], sizes = [1, 1, 2, 128], strides = [1, 1, 1, 1]} : vector<1x5x2x128xf32> to vector<1x1x2x128xf32>
    %18 = vector.shape_cast %17 : vector<1x1x2x128xf32> to vector<1x2x128xf32>
    %19 = vector.extract_strided_slice %9 {offsets = [0, 4, 0, 0], sizes = [1, 1, 2, 128], strides = [1, 1, 1, 1]} : vector<1x5x2x128xf32> to vector<1x1x2x128xf32>
    %20 = vector.shape_cast %19 : vector<1x1x2x128xf32> to vector<1x2x128xf32>
    %21 = vector.extract_strided_slice %10 {offsets = [0, 0, 0, 0], sizes = [1, 1, 2, 128], strides = [1, 1, 1, 1]} : vector<1x5x2x128xf32> to vector<1x1x2x128xf32>
    %22 = vector.shape_cast %21 : vector<1x1x2x128xf32> to vector<1x2x128xf32>
    %23 = vector.extract_strided_slice %10 {offsets = [0, 1, 0, 0], sizes = [1, 1, 2, 128], strides = [1, 1, 1, 1]} : vector<1x5x2x128xf32> to vector<1x1x2x128xf32>
    %24 = vector.shape_cast %23 : vector<1x1x2x128xf32> to vector<1x2x128xf32>
    %25 = vector.extract_strided_slice %10 {offsets = [0, 2, 0, 0], sizes = [1, 1, 2, 128], strides = [1, 1, 1, 1]} : vector<1x5x2x128xf32> to vector<1x1x2x128xf32>
    %26 = vector.shape_cast %25 : vector<1x1x2x128xf32> to vector<1x2x128xf32>
    %27 = vector.extract_strided_slice %10 {offsets = [0, 3, 0, 0], sizes = [1, 1, 2, 128], strides = [1, 1, 1, 1]} : vector<1x5x2x128xf32> to vector<1x1x2x128xf32>
    %28 = vector.shape_cast %27 : vector<1x1x2x128xf32> to vector<1x2x128xf32>
    %29 = vector.extract_strided_slice %10 {offsets = [0, 4, 0, 0], sizes = [1, 1, 2, 128], strides = [1, 1, 1, 1]} : vector<1x5x2x128xf32> to vector<1x1x2x128xf32>
    %30 = vector.shape_cast %29 : vector<1x1x2x128xf32> to vector<1x2x128xf32>
    %31 = arith.addf %12, %16 : vector<1x2x128xf32>
    %32 = arith.addf %14, %18 : vector<1x2x128xf32>
    %33 = arith.mulf %31, %32 : vector<1x2x128xf32>
    %34 = arith.addf %22, %26 : vector<1x2x128xf32>
    %35 = arith.addf %24, %28 : vector<1x2x128xf32>
    %36 = arith.mulf %34, %35 : vector<1x2x128xf32>
    %37 = arith.minimumf %14, %24 : vector<1x2x128xf32>
    %38 = arith.minimumf %18, %28 : vector<1x2x128xf32>
    %39 = arith.addf %37, %38 : vector<1x2x128xf32>
    %40 = arith.minimumf %12, %22 : vector<1x2x128xf32>
    %41 = arith.minimumf %16, %26 : vector<1x2x128xf32>
    %42 = arith.addf %40, %41 : vector<1x2x128xf32>
    %43 = arith.mulf %39, %42 : vector<1x2x128xf32>
    %44 = arith.addf %33, %36 : vector<1x2x128xf32>
    %45 = arith.subf %44, %43 : vector<1x2x128xf32>
    %cst_17 = arith.constant 1.000000e+00 : f32
    %46 = vector.broadcast %cst_17 : f32 to vector<1x2x128xf32>
    %47 = arith.addf %45, %46 : vector<1x2x128xf32>
    %48 = math.log %47 : vector<1x2x128xf32>
    %cst_18 = arith.constant 1.000000e+00 : f32
    %49 = vector.broadcast %cst_18 : f32 to vector<1x2x128xf32>
    %50 = arith.addf %43, %49 : vector<1x2x128xf32>
    %51 = math.log %50 : vector<1x2x128xf32>
    %52 = arith.subf %48, %51 : vector<1x2x128xf32>
    %53 = arith.subf %30, %20 : vector<1x2x128xf32>
    %54 = math.cos %53 : vector<1x2x128xf32>
    %cst_19 = arith.constant 1.000000e+00 : f32
    %55 = vector.broadcast %cst_19 : f32 to vector<1x2x128xf32>
    %56 = arith.subf %55, %54 : vector<1x2x128xf32>
    %57 = arith.mulf %3, %8 : vector<1x2x128xf32>
    %58 = arith.mulf %52, %3 : vector<1x2x128xf32>
    %59 = arith.mulf %56, %3 : vector<1x2x128xf32>
    %c0_20 = arith.constant 0 : index
    %c0_21 = arith.constant 0 : index
    %c0_22 = arith.constant 0 : index
    %c0_23 = arith.constant 0 : index
    %60 = vector.load %arg7[%c0_20, %c0_21, %c0_22, %c0_23] : memref<1x5x2x128xf32, #tpu.memory_space<vmem>>, vector<1x1x2x128xf32>
    %61 = vector.shape_cast %60 : vector<1x1x2x128xf32> to vector<2x128xf32>
    %62 = vector.shape_cast %3 : vector<1x2x128xf32> to vector<2x128xf32>
    %63 = arith.addf %61, %62 : vector<2x128xf32>
    %c0_24 = arith.constant 0 : index
    %c0_25 = arith.constant 0 : index
    %c0_26 = arith.constant 0 : index
    %c0_27 = arith.constant 0 : index
    %64 = vector.load %arg7[%c0_24, %c0_25, %c0_26, %c0_27] : memref<1x5x2x128xf32, #tpu.memory_space<vmem>>, vector<1x1x2x128xf32>
    %65 = vector.shape_cast %64 : vector<1x1x2x128xf32> to vector<2x128xf32>
    %66 = vector.shape_cast %63 : vector<2x128xf32> to vector<1x1x2x128xf32>
    tpu.vector_store %arg7[%c0_24, %c0_25, %c0_26, %c0_27], %66 {strides = array<i32>} : memref<1x5x2x128xf32, #tpu.memory_space<vmem>>, vector<1x1x2x128xf32>,
    %c0_28 = arith.constant 0 : index
    %c1 = arith.constant 1 : index
    %c0_29 = arith.constant 0 : index
    %c0_30 = arith.constant 0 : index
    %67 = vector.load %arg7[%c0_28, %c1, %c0_29, %c0_30] : memref<1x5x2x128xf32, #tpu.memory_space<vmem>>, vector<1x1x2x128xf32>
    %68 = vector.shape_cast %67 : vector<1x1x2x128xf32> to vector<2x128xf32>
    %69 = vector.shape_cast %8 : vector<1x2x128xf32> to vector<2x128xf32>
    %70 = arith.addf %68, %69 : vector<2x128xf32>
    %c0_31 = arith.constant 0 : index
    %c1_32 = arith.constant 1 : index
    %c0_33 = arith.constant 0 : index
    %c0_34 = arith.constant 0 : index
    %71 = vector.load %arg7[%c0_31, %c1_32, %c0_33, %c0_34] : memref<1x5x2x128xf32, #tpu.memory_space<vmem>>, vector<1x1x2x128xf32>
    %72 = vector.shape_cast %71 : vector<1x1x2x128xf32> to vector<2x128xf32>
    %73 = vector.shape_cast %70 : vector<2x128xf32> to vector<1x1x2x128xf32>
    tpu.vector_store %arg7[%c0_31, %c1_32, %c0_33, %c0_34], %73 {strides = array<i32>} : memref<1x5x2x128xf32, #tpu.memory_space<vmem>>, vector<1x1x2x128xf32>,
    %c0_35 = arith.constant 0 : index
    %c2 = arith.constant 2 : index
    %c0_36 = arith.constant 0 : index
    %c0_37 = arith.constant 0 : index
    %74 = vector.load %arg7[%c0_35, %c2, %c0_36, %c0_37] : memref<1x5x2x128xf32, #tpu.memory_space<vmem>>, vector<1x1x2x128xf32>
    %75 = vector.shape_cast %74 : vector<1x1x2x128xf32> to vector<2x128xf32>
    %76 = vector.shape_cast %57 : vector<1x2x128xf32> to vector<2x128xf32>
    %77 = arith.addf %75, %76 : vector<2x128xf32>
    %c0_38 = arith.constant 0 : index
    %c2_39 = arith.constant 2 : index
    %c0_40 = arith.constant 0 : index
    %c0_41 = arith.constant 0 : index
    %78 = vector.load %arg7[%c0_38, %c2_39, %c0_40, %c0_41] : memref<1x5x2x128xf32, #tpu.memory_space<vmem>>, vector<1x1x2x128xf32>
    %79 = vector.shape_cast %78 : vector<1x1x2x128xf32> to vector<2x128xf32>
    %80 = vector.shape_cast %77 : vector<2x128xf32> to vector<1x1x2x128xf32>
    tpu.vector_store %arg7[%c0_38, %c2_39, %c0_40, %c0_41], %80 {strides = array<i32>} : memref<1x5x2x128xf32, #tpu.memory_space<vmem>>, vector<1x1x2x128xf32>,
    %c0_42 = arith.constant 0 : index
    %c3 = arith.constant 3 : index
    %c0_43 = arith.constant 0 : index
    %c0_44 = arith.constant 0 : index
    %81 = vector.load %arg7[%c0_42, %c3, %c0_43, %c0_44] : memref<1x5x2x128xf32, #tpu.memory_space<vmem>>, vector<1x1x2x128xf32>
    %82 = vector.shape_cast %81 : vector<1x1x2x128xf32> to vector<2x128xf32>
    %83 = vector.shape_cast %58 : vector<1x2x128xf32> to vector<2x128xf32>
    %84 = arith.addf %82, %83 : vector<2x128xf32>
    %c0_45 = arith.constant 0 : index
    %c3_46 = arith.constant 3 : index
    %c0_47 = arith.constant 0 : index
    %c0_48 = arith.constant 0 : index
    %85 = vector.load %arg7[%c0_45, %c3_46, %c0_47, %c0_48] : memref<1x5x2x128xf32, #tpu.memory_space<vmem>>, vector<1x1x2x128xf32>
    %86 = vector.shape_cast %85 : vector<1x1x2x128xf32> to vector<2x128xf32>
    %87 = vector.shape_cast %84 : vector<2x128xf32> to vector<1x1x2x128xf32>
    tpu.vector_store %arg7[%c0_45, %c3_46, %c0_47, %c0_48], %87 {strides = array<i32>} : memref<1x5x2x128xf32, #tpu.memory_space<vmem>>, vector<1x1x2x128xf32>,
    %c0_49 = arith.constant 0 : index
    %c4 = arith.constant 4 : index
    %c0_50 = arith.constant 0 : index
    %c0_51 = arith.constant 0 : index
    %88 = vector.load %arg7[%c0_49, %c4, %c0_50, %c0_51] : memref<1x5x2x128xf32, #tpu.memory_space<vmem>>, vector<1x1x2x128xf32>
    %89 = vector.shape_cast %88 : vector<1x1x2x128xf32> to vector<2x128xf32>
    %90 = vector.shape_cast %59 : vector<1x2x128xf32> to vector<2x128xf32>
    %91 = arith.addf %89, %90 : vector<2x128xf32>
    %c0_52 = arith.constant 0 : index
    %c4_53 = arith.constant 4 : index
    %c0_54 = arith.constant 0 : index
    %c0_55 = arith.constant 0 : index
    %92 = vector.load %arg7[%c0_52, %c4_53, %c0_54, %c0_55] : memref<1x5x2x128xf32, #tpu.memory_space<vmem>>, vector<1x1x2x128xf32>
    %93 = vector.shape_cast %92 : vector<1x1x2x128xf32> to vector<2x128xf32>
    %94 = vector.shape_cast %91 : vector<2x128xf32> to vector<1x1x2x128xf32>
    tpu.vector_store %arg7[%c0_52, %c4_53, %c0_54, %c0_55], %94 {strides = array<i32>} : memref<1x5x2x128xf32, #tpu.memory_space<vmem>>, vector<1x1x2x128xf32>,
    return
  }
  func.func @transform_0(%arg0: i32, %arg1: i32) -> (i32, i32, i32) {
    %c0_i32 = arith.constant 0 : i32
    %c0_i32_0 = arith.constant 0 : i32
    return %arg0, %arg1, %c0_i32 : i32, i32, i32
  }
  func.func @transform_1(%arg0: i32, %arg1: i32) -> (i32, i32, i32) {
    %c0_i32 = arith.constant 0 : i32
    %c0_i32_0 = arith.constant 0 : i32
    return %arg0, %arg1, %c0_i32 : i32, i32, i32
  }
  func.func @transform_2(%arg0: i32, %arg1: i32) -> (i32, i32, i32) {
    %c0_i32 = arith.constant 0 : i32
    %c0_i32_0 = arith.constant 0 : i32
    return %arg0, %arg1, %c0_i32 : i32, i32, i32
  }
  func.func @transform_3(%arg0: i32, %arg1: i32) -> (i32, i32, i32, i32) {
    %c0_i32 = arith.constant 0 : i32
    %c0_i32_0 = arith.constant 0 : i32
    %c0_i32_1 = arith.constant 0 : i32
    return %arg0, %c0_i32, %arg1, %c0_i32_0 : i32, i32, i32, i32
  }
  func.func @transform_4(%arg0: i32, %arg1: i32) -> (i32, i32, i32, i32) {
    %c0_i32 = arith.constant 0 : i32
    %c0_i32_0 = arith.constant 0 : i32
    %c0_i32_1 = arith.constant 0 : i32
    return %arg0, %c0_i32, %arg1, %c0_i32_0 : i32, i32, i32, i32
  }
  func.func @transform_5(%arg0: i32, %arg1: i32) -> (i32, i32, i32, i32) {
    %c0_i32 = arith.constant 0 : i32
    %c0_i32_0 = arith.constant 0 : i32
    %c0_i32_1 = arith.constant 0 : i32
    %c0_i32_2 = arith.constant 0 : i32
    return %arg0, %c0_i32, %c0_i32_0, %c0_i32_1 : i32, i32, i32, i32
  }
}

</mosaic_0001>

<llo_original>
// kernel: tpu_custom_call.1
$region0: #{tpu_custom_call.1}
  #allocation0 [shape = 'u32[]', space=smem, size = 0x4, offset = 0x4, fixed_abs, tag = 'smem constant byte address 0x4 - core index']
  #allocation1 [shape = 'u32[144,128]{1,0:T(1,128)}', space=vmem, size = 0x12000, scoped, tag = 'internal scratch']
  %s0 = inlined_call_operand.hbm [shape: f32[2,2,128], index: 0, kind: input, shape index: {}]
  %s1 = inlined_call_operand.hbm [shape: f32[2,2,128], index: 1, kind: input, shape index: {}]
  %s2 = inlined_call_operand.hbm [shape: f32[2,2,128], index: 2, kind: input, shape index: {}]
  %s3 = inlined_call_operand.hbm [shape: f32[2,5,2,128], index: 3, kind: input, shape index: {}]
  %s4 = inlined_call_operand.hbm [shape: f32[2,5,2,128], index: 4, kind: input, shape index: {}]
  %s5 = inlined_call_operand.hbm [shape: f32[2,5,2,128], index: 5, kind: output, shape index: {}]
  %s6 = sld [smem:[#allocation0]]
  $region77: #{tpu_custom_call.1} parent=0
    _
  %s8 = ssub.s32 1, %s6
  %s9 = scalar_select 0, %s8, %s6
  $region1: #{tpu_custom_call.1} parent=0
    #allocation2 [shape = 'u8[2048]{0}', space=vmem, size = 0x800, scoped, tag = 'input window, operand 0']
    #allocation3 [shape = 's32[2]{0}', space=sflag, size = 0x8, scoped, tag = 'scoped memory for tpu_custom_call.1']
    #allocation4 [shape = 's32[2]{0}', space=sflag, size = 0x8, scoped, tag = 'scoped memory for tpu_custom_call.1']
    #allocation5 [shape = 'u8[2048]{0}', space=vmem, size = 0x800, scoped, tag = 'input window, operand 1']
    #allocation6 [shape = 's32[2]{0}', space=sflag, size = 0x8, scoped, tag = 'scoped memory for tpu_custom_call.1']
    #allocation7 [shape = 'u8[2048]{0}', space=vmem, size = 0x800, scoped, tag = 'input window, operand 2']
    #allocation8 [shape = 'u8[10240]{0}', space=vmem, size = 0x2800, scoped, tag = 'input window, operand 3']
    #allocation9 [shape = 's32[2]{0}', space=sflag, size = 0x8, scoped, tag = 'scoped memory for tpu_custom_call.1']
    #allocation10 [shape = 'u8[10240]{0}', space=vmem, size = 0x2800, scoped, tag = 'input window, operand 4']
    #allocation11 [shape = 'u8[10240]{0}', space=vmem, size = 0x2800, scoped, tag = 'output window, operand 0']
    %10 = vsyncpa [#allocation3], 0
    %s11 = scalar_lea.sflag [#allocation3], 1
    %12 = vsyncpa %s11, 0
    %13 = vsyncpa [#allocation6], 0
    %s14 = scalar_lea.sflag [#allocation6], 1
    %15 = vsyncpa %s14, 0
    %16 = vsyncpa [#allocation9], 0
    %s17 = scalar_lea.sflag [#allocation9], 1
    %18 = vsyncpa %s17, 0
    %19 = vsyncpa [#allocation4], 0
    %s20 = scalar_lea.sflag [#allocation4], 1
    %21 = vsyncpa %s20, 0
    loop: start=0, step=1, limit=4
    $region2: #{tpu_custom_call.1} parent=1 // loop_pre_header
      _
    $region3: #{tpu_custom_call.1} parent=1 // loop_header
      %s23 = sphi 0, %s27
      %p24 = scmp.ge.s32.totalorder %s23, 4
      %s30 = sphi 0, %s42
      %s31 = sphi 0, %s38
      %s32 = sphi 0, %s30
      %s33 = sphi 0, %s31
      %s34 = sphi 0, %s32
      %s35 = sphi 0, %s33
      %s47 = sphi 0, %s49
      %s50 = sphi 0, %s47
      %s51 = sphi 0, %s50
      %s67 = sphi 0, %s51
      %s75 = sphi 0, %s77
      %s78 = sphi 0, %s75
      %s79 = sphi 0, %s78
      %s95 = sphi 0, %s79
      %s103 = sphi 0, %s105
      %s106 = sphi 0, %s103
      %s107 = sphi 0, %s106
      %s123 = sphi 0, %s107
      %s131 = sphi 0, %s133
      %s134 = sphi 0, %s131
      %s135 = sphi 0, %s134
      %s151 = sphi 0, %s135
      %s159 = sphi 0, %s161
      %s162 = sphi 0, %s159
      %s163 = sphi 0, %s162
      %s179 = sphi 0, %s163
      %s185 = sphi 0, %s187
      %s188 = sphi 0, %s185
      %s189 = sphi 0, %s188
      %s205 = sphi 0, %s189
    $region4: #{tpu_custom_call.1} parent=1 // loop_header_branch
      %26 = sbr.rel (%p24) target = $region8
    $region5: #{tpu_custom_call.1} parent=1 // loop_body
      %s28 = ssub.s32 %s23, 1
      %s29 = ssub.s32 %s23, 2
      %s36 = sadd.s32 1, %s31
      %p37 = scmp.ge.s32.totalorder %s36, 1
      %s38 = scalar_select %p37, 0, %s36
      %s39 = sadd.s32 1, %s30
      %s40 = scalar_select %p37, %s39, %s30
      %p41 = scmp.ge.s32.totalorder %s40, 2
      %s42 = scalar_select %p41, 0, %s40
      %s43 = ssub.s32 %s30, %s42
      %s44 = ssub.s32 %s31, %s38
      %s45 = sor.u32 %s43, %s44
      %p46 = scmp.eq.s32.totalorder %s45, 0
      %s48 = sadd.s32 %s47, 1
      %s49 = scalar_select %p46, %s47, %s48
      %p52 = pneg %p46
      %p53 = scmp.eq.s32.totalorder %s23, 1
      %p54 = por %p52, %p53
      %p55 = scmp.ne.s32.totalorder %s47, %s50
      %p56 = scmp.eq.s32.totalorder %s23, 0
      %p57 = por %p55, %p56
      %p58 = scmp.ne.s32.totalorder %s47, %s50
      %p59 = scmp.eq.s32.totalorder %s28, 1
      %p60 = por %p58, %p59
      %p61 = scmp.ne.s32.totalorder %s50, %s51
      %p62 = scmp.eq.s32.totalorder %s28, 0
      %p63 = por %p61, %p62
      %p64 = scmp.ne.s32.totalorder %s50, %s51
      %p65 = scmp.eq.s32.totalorder %s29, 1
      %p66 = por %p64, %p65
      %p68 = scmp.ne.s32.totalorder %s51, %s67
      %p69 = scmp.eq.s32.totalorder %s29, 0
      %p70 = por %p68, %p69
      %s71 = ssub.s32 %s30, %s42
      %s72 = ssub.s32 %s31, %s38
      %s73 = sor.u32 %s71, %s72
      %p74 = scmp.eq.s32.totalorder %s73, 0
      %s76 = sadd.s32 %s75, 1
      %s77 = scalar_select %p74, %s75, %s76
      %p80 = pneg %p74
      %p81 = scmp.eq.s32.totalorder %s23, 1
      %p82 = por %p80, %p81
      %p83 = scmp.ne.s32.totalorder %s75, %s78
      %p84 = scmp.eq.s32.totalorder %s23, 0
      %p85 = por %p83, %p84
      %p86 = scmp.ne.s32.totalorder %s75, %s78
      %p87 = scmp.eq.s32.totalorder %s28, 1
      %p88 = por %p86, %p87
      %p89 = scmp.ne.s32.totalorder %s78, %s79
      %p90 = scmp.eq.s32.totalorder %s28, 0
      %p91 = por %p89, %p90
      %p92 = scmp.ne.s32.totalorder %s78, %s79
      %p93 = scmp.eq.s32.totalorder %s29, 1
      %p94 = por %p92, %p93
      %p96 = scmp.ne.s32.totalorder %s79, %s95
      %p97 = scmp.eq.s32.totalorder %s29, 0
      %p98 = por %p96, %p97
      %s99 = ssub.s32 %s30, %s42
      %s100 = ssub.s32 %s31, %s38
      %s101 = sor.u32 %s99, %s100
      %p102 = scmp.eq.s32.totalorder %s101, 0
      %s104 = sadd.s32 %s103, 1
      %s105 = scalar_select %p102, %s103, %s104
      %p108 = pneg %p102
      %p109 = scmp.eq.s32.totalorder %s23, 1
      %p110 = por %p108, %p109
      %p111 = scmp.ne.s32.totalorder %s103, %s106
      %p112 = scmp.eq.s32.totalorder %s23, 0
      %p113 = por %p111, %p112
      %p114 = scmp.ne.s32.totalorder %s103, %s106
      %p115 = scmp.eq.s32.totalorder %s28, 1
      %p116 = por %p114, %p115
      %p117 = scmp.ne.s32.totalorder %s106, %s107
      %p118 = scmp.eq.s32.totalorder %s28, 0
      %p119 = por %p117, %p118
      %p120 = scmp.ne.s32.totalorder %s106, %s107
      %p121 = scmp.eq.s32.totalorder %s29, 1
      %p122 = por %p120, %p121
      %p124 = scmp.ne.s32.totalorder %s107, %s123
      %p125 = scmp.eq.s32.totalorder %s29, 0
      %p126 = por %p124, %p125
      %s127 = ssub.s32 %s30, %s42
      %s128 = ssub.s32 %s31, %s38
      %s129 = sor.u32 %s127, %s128
      %p130 = scmp.eq.s32.totalorder %s129, 0
      %s132 = sadd.s32 %s131, 1
      %s133 = scalar_select %p130, %s131, %s132
      %p136 = pneg %p130
      %p137 = scmp.eq.s32.totalorder %s23, 1
      %p138 = por %p136, %p137
      %p139 = scmp.ne.s32.totalorder %s131, %s134
      %p140 = scmp.eq.s32.totalorder %s23, 0
      %p141 = por %p139, %p140
      %p142 = scmp.ne.s32.totalorder %s131, %s134
      %p143 = scmp.eq.s32.totalorder %s28, 1
      %p144 = por %p142, %p143
      %p145 = scmp.ne.s32.totalorder %s134, %s135
      %p146 = scmp.eq.s32.totalorder %s28, 0
      %p147 = por %p145, %p146
      %p148 = scmp.ne.s32.totalorder %s134, %s135
      %p149 = scmp.eq.s32.totalorder %s29, 1
      %p150 = por %p148, %p149
      %p152 = scmp.ne.s32.totalorder %s135, %s151
      %p153 = scmp.eq.s32.totalorder %s29, 0
      %p154 = por %p152, %p153
      %s155 = ssub.s32 %s30, %s42
      %s156 = ssub.s32 %s31, %s38
      %s157 = sor.u32 %s155, %s156
      %p158 = scmp.eq.s32.totalorder %s157, 0
      %s160 = sadd.s32 %s159, 1
      %s161 = scalar_select %p158, %s159, %s160
      %p164 = pneg %p158
      %p165 = scmp.eq.s32.totalorder %s23, 1
      %p166 = por %p164, %p165
      %p167 = scmp.ne.s32.totalorder %s159, %s162
      %p168 = scmp.eq.s32.totalorder %s23, 0
      %p169 = por %p167, %p168
      %p170 = scmp.ne.s32.totalorder %s159, %s162
      %p171 = scmp.eq.s32.totalorder %s28, 1
      %p172 = por %p170, %p171
      %p173 = scmp.ne.s32.totalorder %s162, %s163
      %p174 = scmp.eq.s32.totalorder %s28, 0
      %p175 = por %p173, %p174
      %p176 = scmp.ne.s32.totalorder %s162, %s163
      %p177 = scmp.eq.s32.totalorder %s29, 1
      %p178 = por %p176, %p177
      %p180 = scmp.ne.s32.totalorder %s163, %s179
      %p181 = scmp.eq.s32.totalorder %s29, 0
      %p182 = por %p180, %p181
      %s183 = ssub.s32 %s30, %s42
      %p184 = scmp.eq.s32.totalorder %s183, 0
      %s186 = sadd.s32 %s185, 1
      %s187 = scalar_select %p184, %s185, %s186
      %p190 = pneg %p184
      %p191 = scmp.eq.s32.totalorder %s23, 1
      %p192 = por %p190, %p191
      %p193 = scmp.ne.s32.totalorder %s185, %s188
      %p194 = scmp.eq.s32.totalorder %s23, 0
      %p195 = por %p193, %p194
      %p196 = scmp.ne.s32.totalorder %s185, %s188
      %p197 = scmp.eq.s32.totalorder %s28, 1
      %p198 = por %p196, %p197
      %p199 = scmp.ne.s32.totalorder %s188, %s189
      %p200 = scmp.eq.s32.totalorder %s28, 0
      %p201 = por %p199, %p200
      %p202 = scmp.ne.s32.totalorder %s188, %s189
      %p203 = scmp.eq.s32.totalorder %s29, 1
      %p204 = por %p202, %p203
      %p206 = scmp.ne.s32.totalorder %s189, %s205
      %p207 = scmp.eq.s32.totalorder %s29, 0
      %p208 = por %p206, %p207
      %p209 = scmp.le.s32.totalorder 1, %s23
      %p210 = scmp.lt.s32.totalorder %s23, 3
      %p211 = pnand %p209, %p210
      %p212 = pneg %p211
      // Predicated region
      $region9: #{tpu_custom_call.1} parent=5 // pred_check
        _
      $region10: #{tpu_custom_call.1} parent=5 // pred_check_branch
        %214 = sbr.rel (%p211) target = $region12
      $region11: #{tpu_custom_call.1} parent=5 // pred_region
        %s215 = ssub.s32 %s23, 1
      $region12: #{tpu_custom_call.1} parent=5 // pred_fallthru
        _
      %p216 = scmp.lt.s32.totalorder %s23, 2
      // Predicated region
      $region13: #{tpu_custom_call.1} parent=5 // pred_check
        %p217 = pneg %p216
      $region14: #{tpu_custom_call.1} parent=5 // pred_check_branch
        %219 = sbr.rel (%p217) target = $region16
      $region15: #{tpu_custom_call.1} parent=5 // pred_region
        // Predicated region
        $region17: #{tpu_custom_call.1} parent=15 // pred_check
          %p220 = pneg %p57
        $region18: #{tpu_custom_call.1} parent=15 // pred_check_branch
          %222 = sbr.rel (%p220) target = $region20
        $region19: #{tpu_custom_call.1} parent=15 // pred_region
          %s223 = sand.u32 %s47, 1
          %s224 = scalar_lea.sflag [#allocation3], %s223
          %s225 = sand.u32 %s47, 1
          %s226 = smul.addr %s225, 2
          %s227 = scalar_lea.vmem [#allocation2], %s226
          %s229 = ssub.s32 32, 32
          %230 = vsyncadd %s224, %s229
          %s231 = sadd.s32 %s31, %s30
          %s232 = smul.addr %s231, 32
          %s233 = scalar_lea.hbm %s0, %s232
          %s235 = sshll.u32 %s227, 4
          %s236 = int_to_ptr.vmem [resolvable:$true] %s235
          %238 = dma.hbm_to_vmem [thread:$0]  %s233, 32, %s236, %s224
        $region20: #{tpu_custom_call.1} parent=15 // pred_fallthru
          _
        // Predicated region
        $region21: #{tpu_custom_call.1} parent=15 // pred_check
          %p239 = pneg %p85
        $region22: #{tpu_custom_call.1} parent=15 // pred_check_branch
          %241 = sbr.rel (%p239) target = $region24
        $region23: #{tpu_custom_call.1} parent=15 // pred_region
          %s242 = sand.u32 %s23, 1
          %s243 = scalar_lea.sflag [#allocation6], %s242
          %s244 = sand.u32 %s75, 1
          %s245 = smul.addr %s244, 2
          %s246 = scalar_lea.vmem [#allocation5], %s245
          %s248 = ssub.s32 32, 32
          %249 = vsyncadd %s243, %s248
          %s250 = sadd.s32 %s31, %s30
          %s251 = smul.addr %s250, 32
          %s252 = scalar_lea.hbm %s1, %s251
          %s254 = sshll.u32 %s246, 4
          %s255 = int_to_ptr.vmem [resolvable:$true] %s254
          %257 = dma.hbm_to_vmem [thread:$0]  %s252, 32, %s255, %s243
        $region24: #{tpu_custom_call.1} parent=15 // pred_fallthru
          _
        // Predicated region
        $region25: #{tpu_custom_call.1} parent=15 // pred_check
          %p258 = pneg %p113
        $region26: #{tpu_custom_call.1} parent=15 // pred_check_branch
          %260 = sbr.rel (%p258) target = $region28
        $region27: #{tpu_custom_call.1} parent=15 // pred_region
          %s261 = sand.u32 %s23, 1
          %s262 = scalar_lea.sflag [#allocation6], %s261
          %s263 = sand.u32 %s103, 1
          %s264 = smul.addr %s263, 2
          %s265 = scalar_lea.vmem [#allocation7], %s264
          %s267 = ssub.s32 32, 32
          %268 = vsyncadd %s262, %s267
          %s269 = sadd.s32 %s31, %s30
          %s270 = smul.addr %s269, 32
          %s271 = scalar_lea.hbm %s2, %s270
          %s273 = sshll.u32 %s265, 4
          %s274 = int_to_ptr.vmem [resolvable:$true] %s273
          %276 = dma.hbm_to_vmem [thread:$0]  %s271, 32, %s274, %s262
        $region28: #{tpu_custom_call.1} parent=15 // pred_fallthru
          _
        // Predicated region
        $region29: #{tpu_custom_call.1} parent=15 // pred_check
          %p277 = pneg %p141
        $region30: #{tpu_custom_call.1} parent=15 // pred_check_branch
          %279 = sbr.rel (%p277) target = $region32
        $region31: #{tpu_custom_call.1} parent=15 // pred_region
          %s280 = sand.u32 %s23, 1
          %s281 = scalar_lea.sflag [#allocation9], %s280
          %s282 = sand.u32 %s131, 1
          %s283 = smul.addr %s282, 10
          %s284 = scalar_lea.vmem [#allocation8], %s283
          %s286 = ssub.s32 160, 160
          %287 = vsyncadd %s281, %s286
          %s288 = smul.addr %s30, 5
          %s289 = sadd.s32 %s31, %s288
          %s290 = smul.addr %s289, 32
          %s291 = scalar_lea.hbm %s3, %s290
          %s292 = sshll.u32 %s284, 4
          %s293 = int_to_ptr.vmem [resolvable:$true] %s292
          %298 = dma.hbm_to_vmem [thread:$0]  %s291, 160, %s293, %s281, 32, 32, 2
        $region32: #{tpu_custom_call.1} parent=15 // pred_fallthru
          _
        // Predicated region
        $region33: #{tpu_custom_call.1} parent=15 // pred_check
          %p299 = pneg %p169
        $region34: #{tpu_custom_call.1} parent=15 // pred_check_branch
          %301 = sbr.rel (%p299) target = $region36
        $region35: #{tpu_custom_call.1} parent=15 // pred_region
          %s302 = sand.u32 %s23, 1
          %s303 = scalar_lea.sflag [#allocation9], %s302
          %s304 = sand.u32 %s159, 1
          %s305 = smul.addr %s304, 10
          %s306 = scalar_lea.vmem [#allocation10], %s305
          %s308 = ssub.s32 160, 160
          %309 = vsyncadd %s303, %s308
          %s310 = smul.addr %s30, 5
          %s311 = sadd.s32 %s31, %s310
          %s312 = smul.addr %s311, 32
          %s313 = scalar_lea.hbm %s4, %s312
          %s314 = sshll.u32 %s306, 4
          %s315 = int_to_ptr.vmem [resolvable:$true] %s314
          %320 = dma.hbm_to_vmem [thread:$0]  %s313, 160, %s315, %s303, 32, 32, 2
        $region36: #{tpu_custom_call.1} parent=15 // pred_fallthru
          _
      $region16: #{tpu_custom_call.1} parent=5 // pred_fallthru
        _
      %p321 = scmp.le.s32.totalorder 1, %s23
      %p322 = scmp.lt.s32.totalorder %s23, 3
      %p323 = pnand %p321, %p322
      %p324 = pneg %p323
      // Predicated region
      $region37: #{tpu_custom_call.1} parent=5 // pred_check
        _
      $region38: #{tpu_custom_call.1} parent=5 // pred_check_branch
        %326 = sbr.rel (%p323) target = $region40
      $region39: #{tpu_custom_call.1} parent=5 // pred_region
        %s327 = ssub.s32 %s23, 1
        %s328 = sand.u32 %s50, 1
        %s329 = scalar_lea.sflag [#allocation3], %s328
        %s330 = sand.u32 %s50, 1
        %s331 = smul.addr %s330, 2
        %s332 = scalar_lea.vmem [#allocation2], %s331
        // Predicated region
        $region41: #{tpu_custom_call.1} parent=39 // pred_check
          %p333 = pneg %p63
        $region42: #{tpu_custom_call.1} parent=39 // pred_check_branch
          %335 = sbr.rel (%p333) target = $region44
        $region43: #{tpu_custom_call.1} parent=39 // pred_region
          %336 = dma.done %s329, 32
        $region44: #{tpu_custom_call.1} parent=39 // pred_fallthru
          _
        %s337 = sand.u32 %s28, 1
        %s338 = scalar_lea.sflag [#allocation6], %s337
        %s339 = sand.u32 %s78, 1
        %s340 = smul.addr %s339, 2
        %s341 = scalar_lea.vmem [#allocation5], %s340
        // Predicated region
        $region45: #{tpu_custom_call.1} parent=39 // pred_check
          %p342 = pneg %p91
        $region46: #{tpu_custom_call.1} parent=39 // pred_check_branch
          %344 = sbr.rel (%p342) target = $region48
        $region47: #{tpu_custom_call.1} parent=39 // pred_region
          %345 = dma.done %s338, 32
        $region48: #{tpu_custom_call.1} parent=39 // pred_fallthru
          _
        %s346 = sand.u32 %s28, 1
        %s347 = scalar_lea.sflag [#allocation6], %s346
        %s348 = sand.u32 %s106, 1
        %s349 = smul.addr %s348, 2
        %s350 = scalar_lea.vmem [#allocation7], %s349
        // Predicated region
        $region49: #{tpu_custom_call.1} parent=39 // pred_check
          %p351 = pneg %p119
        $region50: #{tpu_custom_call.1} parent=39 // pred_check_branch
          %353 = sbr.rel (%p351) target = $region52
        $region51: #{tpu_custom_call.1} parent=39 // pred_region
          %354 = dma.done %s347, 32
        $region52: #{tpu_custom_call.1} parent=39 // pred_fallthru
          _
        %s355 = sand.u32 %s28, 1
        %s356 = scalar_lea.sflag [#allocation9], %s355
        %s357 = sand.u32 %s134, 1
        %s358 = smul.addr %s357, 10
        %s359 = scalar_lea.vmem [#allocation8], %s358
        // Predicated region
        $region53: #{tpu_custom_call.1} parent=39 // pred_check
          %p360 = pneg %p147
        $region54: #{tpu_custom_call.1} parent=39 // pred_check_branch
          %362 = sbr.rel (%p360) target = $region56
        $region55: #{tpu_custom_call.1} parent=39 // pred_region
          %363 = dma.done %s356, 160
        $region56: #{tpu_custom_call.1} parent=39 // pred_fallthru
          _
        %s364 = sand.u32 %s28, 1
        %s365 = scalar_lea.sflag [#allocation9], %s364
        %s366 = sand.u32 %s162, 1
        %s367 = smul.addr %s366, 10
        %s368 = scalar_lea.vmem [#allocation10], %s367
        // Predicated region
        $region57: #{tpu_custom_call.1} parent=39 // pred_check
          %p369 = pneg %p175
        $region58: #{tpu_custom_call.1} parent=39 // pred_check_branch
          %371 = sbr.rel (%p369) target = $region60
        $region59: #{tpu_custom_call.1} parent=39 // pred_region
          %372 = dma.done %s365, 160
        $region60: #{tpu_custom_call.1} parent=39 // pred_fallthru
          _
        %s373 = sand.u32 %s50, 1
        %s374 = scalar_lea.sflag [#allocation3], %s373
        %s375 = sand.u32 %s50, 1
        %s376 = smul.addr %s375, 2
        %s377 = scalar_lea.vmem [#allocation2], %s376
        %p378 = pneg %p63
        %p379 = pneg %p60
        %s380 = sand.u32 %s28, 1
        %s381 = scalar_lea.sflag [#allocation6], %s380
        %s382 = sand.u32 %s78, 1
        %s383 = smul.addr %s382, 2
        %s384 = scalar_lea.vmem [#allocation5], %s383
        %p385 = pneg %p91
        %p386 = pneg %p88
        %s387 = sand.u32 %s28, 1
        %s388 = scalar_lea.sflag [#allocation6], %s387
        %s389 = sand.u32 %s106, 1
        %s390 = smul.addr %s389, 2
        %s391 = scalar_lea.vmem [#allocation7], %s390
        %p392 = pneg %p119
        %p393 = pneg %p116
        %s394 = sand.u32 %s28, 1
        %s395 = scalar_lea.sflag [#allocation9], %s394
        %s396 = sand.u32 %s134, 1
        %s397 = smul.addr %s396, 10
        %s398 = scalar_lea.vmem [#allocation8], %s397
        %p399 = pneg %p147
        %p400 = pneg %p144
        %s401 = sand.u32 %s28, 1
        %s402 = scalar_lea.sflag [#allocation9], %s401
        %s403 = sand.u32 %s162, 1
        %s404 = smul.addr %s403, 10
        %s405 = scalar_lea.vmem [#allocation10], %s404
        %p406 = pneg %p175
        %p407 = pneg %p172
        %p408 = pneg %p201
        %p409 = pneg %p198
        %s410 = sand.u32 %s188, 1
        %s411 = scalar_lea.sflag [#allocation4], %s410
        %s412 = sand.u32 %s188, 1
        %s413 = smul.addr %s412, 10
        %s414 = scalar_lea.vmem [#allocation11], %s413
        %p415 = scmp.eq.s32.totalorder %s33, 0
        // Predicated region
        $region61: #{tpu_custom_call.1} parent=39 // pred_check
          %p416 = pneg %p415
        $region62: #{tpu_custom_call.1} parent=39 // pred_check_branch
          %418 = sbr.rel (%p416) target = $region64
        $region63: #{tpu_custom_call.1} parent=39 // pred_region
          %419 = vst [vmem:[%s414] sm:$0x3] 0.0
          %420 = vst [vmem:[%s414 + $0x2] sm:$0x3] 0.0
          %421 = vst [vmem:[%s414 + $0x4] sm:$0x3] 0.0
          %422 = vst [vmem:[%s414 + $0x6] sm:$0x3] 0.0
          %423 = vst [vmem:[%s414 + $0x8] sm:$0x3] 0.0
        $region64: #{tpu_custom_call.1} parent=39 // pred_fallthru
          _
        %v424 = vld [vmem:[%s332] sm:$0x3]
        %v425 = vld [vmem:[%s341] sm:$0x3]
        %v426 = vld [vmem:[%s350] sm:$0x3]
        %v427 = vsub.f32 1.0, %v426
        %v428 = vmul.f32 %v425, %v427
        %v429 = vld [vmem:[%s359] sm:$0x3]
        %v430 = vld [vmem:[%s359 + $0x2] sm:$0x3]
        %v431 = vld [vmem:[%s359 + $0x4] sm:$0x3]
        %v432 = vld [vmem:[%s359 + $0x6] sm:$0x3]
        %v433 = vld [vmem:[%s359 + $0x8] sm:$0x3]
        %v434 = vld [vmem:[%s368] sm:$0x3]
        %v435 = vld [vmem:[%s368 + $0x2] sm:$0x3]
        %v436 = vld [vmem:[%s368 + $0x4] sm:$0x3]
        %v437 = vld [vmem:[%s368 + $0x6] sm:$0x3]
        %v438 = vld [vmem:[%s368 + $0x8] sm:$0x3]
        %v439 = vadd.f32 %v429, %v431
        %v440 = vadd.f32 %v430, %v432
        %v441 = vmul.f32 %v439, %v440
        %v442 = vadd.f32 %v434, %v436
        %v443 = vadd.f32 %v435, %v437
        %v444 = vmul.f32 %v442, %v443
        %v445 = vmin.f32 %v430, %v435
        %v446 = vmin.f32 %v432, %v437
        %v447 = vadd.f32 %v445, %v446
        %v448 = vmin.f32 %v429, %v434
        %v449 = vmin.f32 %v431, %v436
        %v450 = vadd.f32 %v448, %v449
        %v451 = vmul.f32 %v447, %v450
        %v452 = vadd.f32 %v441, %v444
        %v453 = vsub.f32 %v452, %v451
        %v454 = vadd.f32 %v453, 1.0
        %v455 = vlog2.pop %v454
        %v456 = vmul.f32 %v455, 0.6931472
        %v457 = vadd.f32 %v451, 1.0
        %v458 = vlog2.pop %v457
        %v459 = vmul.f32 %v458, 0.6931472
        %v460 = vsub.f32 %v456, %v459
        %v461 = vsub.f32 %v438, %v433
        %v462 = vand.u32 2147483647, %v461
        %vm463 = vcmp.le.f32.partialorder %v462, 0.7853982
        %vm464 = vcmp.lt.s32.totalorder %v461, 0
        %v465 = vand.u32 %v461, 2139095040
        %v466 = vshrl.u32 %v465, 23
        %v467 = vsub.s32 %v466, 127
        %v468 = vand.u32 2147483647, %v461
        %v469 = vand.u32 %v468, 8388607
        %v470 = vor.u32 %v469, 8388608
        %v471 = vsub.s32 0, %v470
        %v472 = vadd.s32 %v467, 1
        %vm473 = vcmp.gt.s32.totalorder %v472, 0
        %v474 = vsel %vm473, %v472, 0
        %v475 = vshrl.u32 %v474, 5
        %v476 = vand.u32 %v474, 31
        %v477 = vsub.s32 32, %v476
        %v478 = vshrl.u32 683565275, %v477
        %v479 = vshll.u32 683565275, %v476
        %v480 = vshrl.u32 2475754826, %v477
        %v481 = vor.u32 %v479, %v480
        %v482 = vshll.u32 2475754826, %v476
        %v483 = vshrl.u32 2131351028, %v477
        %v484 = vor.u32 %v482, %v483
        %v485 = vshll.u32 2131351028, %v476
        %v486 = vshrl.u32 2102212464, %v477
        %v487 = vor.u32 %v485, %v486
        %v488 = vshll.u32 2102212464, %v476
        %v489 = vshrl.u32 920167782, %v477
        %v490 = vor.u32 %v488, %v489
        %v491 = vshll.u32 920167782, %v476
        %v492 = vshrl.u32 1326507024, %v477
        %v493 = vor.u32 %v491, %v492
        %vm494 = vcmp.lt.s32.totalorder %v475, 1
        %vm495 = vcmp.lt.s32.totalorder %v475, 2
        %vm496 = vcmp.lt.s32.totalorder %v475, 3
        %vm497 = vcmp.lt.s32.totalorder %v475, 4
        %v498 = vsel %vm494, %v478, %v481
        %v499 = vsel %vm497, %v487, 2102212464
        %v500 = vsel %vm496, %v484, %v499
        %v501 = vsel %vm495, %v498, %v500
        %v502 = vsel %vm494, %v481, %v484
        %v503 = vsel %vm497, %v490, 920167782
        %v504 = vsel %vm496, %v487, %v503
        %v505 = vsel %vm495, %v502, %v504
        %v506 = vsel %vm494, %v484, %v487
        %v507 = vsel %vm497, %v493, 1326507024
        %v508 = vsel %vm496, %v490, %v507
        %v509 = vsel %vm495, %v506, %v508
        %v510 = vshll.u32 %v470, 8
        %v511 = vmul.u32.u64.compose %v510, %v509
        %v512 = vextract.low.u32 %v511
        %v513 = vextract.high.u32 %v511
        %v514 = vmul.u32.u64.compose %v510, %v505
        %v515 = vextract.low.u32 %v514
        %v516 = vextract.high.u32 %v514
        %v517 = vmul.u32 %v510, %v501
        %v518 = vadd.s32 %v513, %v515
        %vm519 = vc.u32 %v513, %v515
        %v520 = vadd.s32 %v516, 1
        %v521 = vsel %vm519, %v520, %v516
        %v522 = vadd.s32 %v517, %v521
        %v523 = vadd.s32 %v522, 536870912
        %v524 = vshrl.u32 %v523, 30
        %v525 = vshll.u32 %v524, 30
        %v526 = vsub.s32 %v522, %v525
        %vm527 = vcmp.lt.s32.totalorder %v526, 0
        %v528 = vsub.s32 0, %v526
        %v529 = vsel %vm527, %v528, %v526
        %v530 = vclz %v529
        %v531 = vsub.s32 %v530, 2
        %vm532 = vcmp.gt.s32.totalorder 0, %v531
        %v533 = vsel %vm532, 0, %v531
        %v534 = vsub.s32 32, %v533
        %v535 = vshll.u32 %v526, %v533
        %v536 = vshrl.u32 %v518, %v534
        %v537 = vor.u32 %v535, %v536
        %v538 = vsub.s32 4294967266, %v533
        %v539 = vadd.s32 %v538, 127
        %v540 = vshll.u32 %v539, 23
        %v541 = vor.u32 4788187, %v540
        %v542 = vand.u32 2147483647, %v541
        %v544 = vcvt.s32.f32 %v537
        %v545 = vmul.f32 %v544, %v542
        %v546 = vxor.u32 %v545, 2147483648
        %v547 = vsel %vm464, %v546, %v545
        %v548 = vsub.s32 4, %v524
        %v549 = vsel %vm464, %v548, %v524
        %v550 = vsel %vm463, %v461, %v547
        %v551 = vsel %vm463, 0, %v549
        %v552 = vcosq.f32.pop %v550
        %v553 = vsinq.f32.pop %v550
        %vm554 = vweird.f32 %v461
        %v555 = vand.u32 %v551, 3
        %vm556 = vcmp.lt.s32.totalorder %v555, 2
        %vm557 = vcmp.eq.s32.totalorder %v555, 0
        %v558 = vxor.u32 %v553, 2147483648
        %v559 = vsel %vm557, %v552, %v558
        %vm560 = vcmp.eq.s32.totalorder %v555, 2
        %v561 = vxor.u32 %v552, 2147483648
        %v562 = vsel %vm560, %v561, %v553
        %v563 = vsel %vm556, %v559, %v562
        %v564 = vsel %vm554, nan, %v563
        %v565 = vsub.f32 1.0, %v564
        %v566 = vmul.f32 %v424, %v428
        %v567 = vmul.f32 %v460, %v424
        %v568 = vmul.f32 %v565, %v424
        %v569 = vld [vmem:[%s414] sm:$0x3]
        %v570 = vadd.f32 %v569, %v424
        %571 = vst [vmem:[%s414] sm:$0x3] %v570
        %s572 = scalar_lea.vmem %s414, 2 [#allocation11]
        %v573 = vld [vmem:[%s572] sm:$0x3]
        %v574 = vadd.f32 %v573, %v428
        %575 = vst [vmem:[%s572] sm:$0x3] %v574
        %s576 = scalar_lea.vmem %s414, 4 [#allocation11]
        %v577 = vld [vmem:[%s576] sm:$0x3]
        %v578 = vadd.f32 %v577, %v566
        %579 = vst [vmem:[%s576] sm:$0x3] %v578
        %s580 = scalar_lea.vmem %s414, 6 [#allocation11]
        %v581 = vld [vmem:[%s580] sm:$0x3]
        %v582 = vadd.f32 %v581, %v567
        %583 = vst [vmem:[%s580] sm:$0x3] %v582
        %s584 = scalar_lea.vmem %s414, 8 [#allocation11]
        %v585 = vld [vmem:[%s584] sm:$0x3]
        %v586 = vadd.f32 %v585, %v568
        %587 = vst [vmem:[%s584] sm:$0x3] %v586
        %s588 = sand.u32 %s188, 1
        %s589 = scalar_lea.sflag [#allocation4], %s588
        %s590 = sand.u32 %s188, 1
        %s591 = smul.addr %s590, 10
        %s592 = scalar_lea.vmem [#allocation11], %s591
        // Predicated region
        $region65: #{tpu_custom_call.1} parent=39 // pred_check
          %p593 = pneg %p198
        $region66: #{tpu_custom_call.1} parent=39 // pred_check_branch
          %595 = sbr.rel (%p593) target = $region68
        $region67: #{tpu_custom_call.1} parent=39 // pred_region
          %s597 = ssub.s32 160, 160
          %598 = vsyncadd %s589, %s597
          %s599 = smul.addr %s32, 5
          %s600 = smul.addr %s599, 32
          %s601 = scalar_lea.hbm %s5, %s600
          %s602 = sshll.u32 %s592, 4
          %s603 = int_to_ptr.vmem [resolvable:$true] %s602
          %608 = dma.vmem_to_hbm [thread:$0]  %s603, 160, %s601, %s589, 32, 32, 2
        $region68: #{tpu_custom_call.1} parent=39 // pred_fallthru
          _
      $region40: #{tpu_custom_call.1} parent=5 // pred_fallthru
        _
      %p609 = scmp.le.s32.totalorder 2, %s23
      // Predicated region
      $region69: #{tpu_custom_call.1} parent=5 // pred_check
        %p610 = pneg %p609
      $region70: #{tpu_custom_call.1} parent=5 // pred_check_branch
        %612 = sbr.rel (%p610) target = $region72
      $region71: #{tpu_custom_call.1} parent=5 // pred_region
        %s613 = ssub.s32 %s23, 2
        // Predicated region
        $region73: #{tpu_custom_call.1} parent=71 // pred_check
          %p614 = pneg %p204
        $region74: #{tpu_custom_call.1} parent=71 // pred_check_branch
          %616 = sbr.rel (%p614) target = $region76
        $region75: #{tpu_custom_call.1} parent=71 // pred_region
          %s617 = sand.u32 %s189, 1
          %s618 = scalar_lea.sflag [#allocation4], %s617
          %s619 = sand.u32 %s189, 1
          %s620 = smul.addr %s619, 10
          %s621 = scalar_lea.vmem [#allocation11], %s620
          %622 = dma.done %s618, 160
        $region76: #{tpu_custom_call.1} parent=71 // pred_fallthru
          _
      $region72: #{tpu_custom_call.1} parent=5 // pred_fallthru
        _
    $region6: #{tpu_custom_call.1} parent=1 // loop_footer
      %s27 = sadd.s32 1, %s23
    $region7: #{tpu_custom_call.1} parent=1 // loop_footer_branch
      %22 = sbr.rel target = $region3
    $region8: #{tpu_custom_call.1} parent=1 // loop_exit
      _
    %623 = vsyncpa [#allocation3], 1
    %s624 = scalar_lea.sflag [#allocation3], 1
    %625 = vsyncpa %s624, 1
    %626 = vsyncpa [#allocation6], 1
    %s627 = scalar_lea.sflag [#allocation6], 1
    %628 = vsyncpa %s627, 1
    %629 = vsyncpa [#allocation9], 1
    %s630 = scalar_lea.sflag [#allocation9], 1
    %631 = vsyncpa %s630, 1
    %632 = vsyncpa [#allocation4], 1
    %s633 = scalar_lea.sflag [#allocation4], 1
    %634 = vsyncpa %s633, 1

</llo_original>
